<compile_context>
chip_gen: v7x
topology: tpu7x:2x2x1
jax: 0.10.0
libtpu: 0.0.40
codegen_flags: <defaults>
</compile_context>

<pallas_src>
import jax
import jax.numpy as jnp
from jax.experimental import pallas as pl
from jax.experimental.pallas import tpu as pltpu  # noqa: F401  (kept for TPU-specific extensions)


def _mlp_kernel(x_ref, p_ref, o_ref):
    """VPU/XLU-only forward in transposed (feature-on-sublane, batch-on-lane) layout.

    x_ref: (1, Np)   -- input row, batch on lanes
    p_ref: (H, 4)    -- packed params: [:,0]=w1 col, [:,1]=b1, [:,2]=w2 col, [:,3]=b2 (replicated)
    o_ref: (1, Np)   -- lane-dense output row
    """
    x = x_ref[...]                                   # (1, Np)
    p = p_ref[...]                                   # (H, 4)
    w1c = p[:, 0:1]                                  # (H, 1) lane-broadcast source
    b1c = p[:, 1:2]                                  # (H, 1)
    w2c = p[:, 2:3]                                  # (H, 1)
    b2 = p[0:1, 3:4]                                 # (1, 1)

    # Hidden layer: broadcast multiply + bias + ReLU, all on the VPU.
    h = jnp.maximum(w1c * x + b1c, 0.0)              # (H, Np)
    # Output layer: elementwise mul (VPU) + cross-sublane reduce (XLU) + bias.
    y = jnp.sum(w2c * h, axis=0, keepdims=True) + b2  # (1, Np)
    o_ref[...] = y.astype(o_ref.dtype)


@jax.jit
def net_forward(x, w1, b1, w2, b2):
    """x: (N, 1) f32; w1: (1, H); b1: (1, H); w2: (H, 1); b2: (1, 1).

    Weights are stored in (in_features, out_features) layout (i.e. already
    "W.T" relative to torch.nn.Linear), so the math matches x @ W.T + b.
    """
    N, F = x.shape
    H = w1.shape[1]
    O = w2.shape[1]
    assert F == 1 and O == 1, "optimized kernel is specialized for n_feature=1, n_output=1"

    LANES = 128
    N_pad = ((N + LANES - 1) // LANES) * LANES

    # Transpose + pad so the batch dimension is lane-dense and 128-aligned.
    x_t = jnp.zeros((1, N_pad), jnp.float32).at[0, :N].set(x[:, 0])

    # Pack all parameters into a single (H, 4) operand -> one DMA.
    params = jnp.stack(
        [
            w1.reshape(H),                                   # w1 column
            b1.reshape(H),                                   # b1
            w2.reshape(H),                                   # w2 column
            jnp.broadcast_to(b2.reshape(1), (H,)),           # b2 (replicated)
        ],
        axis=1,
    ).astype(jnp.float32)                                     # (H, 4)

    full = lambda shape: pl.BlockSpec(shape, lambda: (0,) * len(shape))

    y_t = pl.pallas_call(
        _mlp_kernel,
        out_shape=jax.ShapeDtypeStruct((1, N_pad), jnp.float32),
        in_specs=[full((1, N_pad)), full((H, 4))],
        out_specs=full((1, N_pad)),
    )(x_t, params)

    # Drop the lane padding and restore the (N, 1) column layout.
    return y_t[0, :N].reshape(N, 1)


def init_params(key, n_feature, n_hidden, n_output):
    """Deterministic init mimicking torch.nn.Linear's U(-1/sqrt(fan_in), 1/sqrt(fan_in))."""
    k1, k2, k3, k4 = jax.random.split(key, 4)
    bound1 = 1.0 / jnp.sqrt(jnp.float32(n_feature))
    bound2 = 1.0 / jnp.sqrt(jnp.float32(n_hidden))
    # Stored directly in (in, out) layout (i.e. already "W.T" relative to torch).
    w1 = jax.random.uniform(k1, (n_feature, n_hidden), jnp.float32, -bound1, bound1)
    b1 = jax.random.uniform(k2, (1, n_hidden), jnp.float32, -bound1, bound1)
    w2 = jax.random.uniform(k3, (n_hidden, n_output), jnp.float32, -bound2, bound2)
    b2 = jax.random.uniform(k4, (1, n_output), jnp.float32, -bound2, bound2)
    return w1, b1, w2, b2


if __name__ == "__main__":
    n_feature, n_hidden, n_output = 1, 32, 1
    N = 100  # matches torch.linspace(-1, 1, 100).unsqueeze(1) -> (100, 1)

    key = jax.random.PRNGKey(0)
    w1, b1, w2, b2 = init_params(key, n_feature, n_hidden, n_output)

    # Same input as the reference script: linspace(-1, 1, 100) with a feature dim.
    x = jnp.linspace(-1.0, 1.0, N, dtype=jnp.float32).reshape(N, 1)

    out = jax.block_until_ready(net_forward(x, w1, b1, w2, b2))

    # Pure-JAX reference for correctness.
    ref = jnp.maximum(x @ w1 + b1, 0.0) @ w2 + b2
    assert out.shape == (N, n_output)
    assert jnp.allclose(out, ref, atol=1e-5, rtol=1e-5)

    print("KERNEL_OK")
</pallas_src>

<mosaic_0001>
module attributes {stable_mosaic.version = 11 : i64} {
  func.func @_mlp_kernel(%arg0: memref<1x128xf32, #tpu.memory_space<vmem>>, %arg1: memref<32x4xf32, #tpu.memory_space<vmem>>, %arg2: memref<1x128xf32, #tpu.memory_space<vmem>>) attributes {dimension_semantics = [], scalar_prefetch = 0 : i64, scratch_operands = 0 : i64, tpu.core_type = #tpu.core_type<tc>} {
    %c0 = arith.constant 0 : index
    %c0_0 = arith.constant 0 : index
    %0 = vector.load %arg0[%c0, %c0_0] : memref<1x128xf32, #tpu.memory_space<vmem>>, vector<1x128xf32>
    %c0_1 = arith.constant 0 : index
    %c0_2 = arith.constant 0 : index
    %1 = vector.load %arg1[%c0_1, %c0_2] : memref<32x4xf32, #tpu.memory_space<vmem>>, vector<32x4xf32>
    %2 = vector.extract_strided_slice %1 {offsets = [0, 0], sizes = [32, 1], strides = [1, 1]} : vector<32x4xf32> to vector<32x1xf32>
    %3 = vector.extract_strided_slice %1 {offsets = [0, 1], sizes = [32, 1], strides = [1, 1]} : vector<32x4xf32> to vector<32x1xf32>
    %4 = vector.extract_strided_slice %1 {offsets = [0, 2], sizes = [32, 1], strides = [1, 1]} : vector<32x4xf32> to vector<32x1xf32>
    %5 = vector.extract_strided_slice %1 {offsets = [0, 3], sizes = [1, 1], strides = [1, 1]} : vector<32x4xf32> to vector<1x1xf32>
    %6 = vector.broadcast %2 : vector<32x1xf32> to vector<32x128xf32>
    %7 = vector.broadcast %0 : vector<1x128xf32> to vector<32x128xf32>
    %8 = arith.mulf %6, %7 : vector<32x128xf32>
    %9 = vector.broadcast %3 : vector<32x1xf32> to vector<32x128xf32>
    %10 = arith.addf %8, %9 : vector<32x128xf32>
    %cst = arith.constant 0.000000e+00 : f32
    %11 = vector.broadcast %cst : f32 to vector<32x128xf32>
    %12 = arith.maximumf %10, %11 : vector<32x128xf32>
    %13 = vector.broadcast %4 : vector<32x1xf32> to vector<32x128xf32>
    %14 = arith.mulf %13, %12 : vector<32x128xf32>
    %cst_3 = arith.constant dense<0.000000e+00> : vector<128xf32>
    %15 = vector.multi_reduction <add>, %14, %cst_3 [0] : vector<32x128xf32> to vector<128xf32>
    %16 = vector.shape_cast %15 : vector<128xf32> to vector<1x128xf32>
    %17 = vector.broadcast %5 : vector<1x1xf32> to vector<1x128xf32>
    %18 = arith.addf %16, %17 : vector<1x128xf32>
    %c0_4 = arith.constant 0 : index
    %c0_5 = arith.constant 0 : index
    %19 = vector.load %arg2[%c0_4, %c0_5] : memref<1x128xf32, #tpu.memory_space<vmem>>, vector<1x128xf32>
    tpu.vector_store %arg2[%c0_4, %c0_5], %18 {strides = array<i32>} : memref<1x128xf32, #tpu.memory_space<vmem>>, vector<1x128xf32>,
    return
  }
}

</mosaic_0001>

<llo_original>
// kernel: net_forward.1
$region0: #{net_forward.1}
  #allocation0 [shape = 'u32[]', space=smem, size = 0x4, offset = 0x4, fixed_abs, tag = 'smem constant byte address 0x4 - core index']
  #allocation1 [shape = 'u32[144,128]{1,0:T(1,128)}', space=vmem, size = 0x12000, scoped, tag = 'internal scratch']
  %s0 = inlined_call_operand.vmem [shape: f32[1,128], index: 0, kind: input, shape index: {}]
  %s1 = inlined_call_operand.vmem [shape: f32[32,4], index: 1, kind: input, shape index: {}]
  %s2 = inlined_call_operand.vmem [shape: f32[1,128], index: 2, kind: output, shape index: {}]
  %s3 = sld [smem:[#allocation0]]
  $region18: #{net_forward.1} parent=0
    _
  %s5 = ssub.s32 1, %s3
  %s6 = scalar_select 0, %s5, %s3
  // Predicated region
  $region2: #{net_forward.1} parent=0 // pred_check
    _
  $region3: #{net_forward.1} parent=0 // pred_check_branch
    %8 = sbr.rel (0) target = $region5
  $region4: #{net_forward.1} parent=0 // pred_region
    _
  $region5: #{net_forward.1} parent=0 // pred_fallthru
    _
  // Predicated region
  $region6: #{net_forward.1} parent=0 // pred_check
    _
  $region7: #{net_forward.1} parent=0 // pred_check_branch
    %10 = sbr.rel (0) target = $region9
  $region8: #{net_forward.1} parent=0 // pred_region
    _
  $region9: #{net_forward.1} parent=0 // pred_fallthru
    _
  %v11 = vld [vmem:[%s0] sm:$0x1]
  %v12 = vld [vmem:[%s1] sm:$0xff]
  %v13 = vld [vmem:[%s1 + $0x8] sm:$0xff]
  %v14 = vld [vmem:[%s1 + $0x10] sm:$0xff]
  %v15 = vld [vmem:[%s1 + $0x18] sm:$0xff]
  %17 = vset.pattern.permute.xlu0 0
  %18 = vperm.xlu0 %17, %v12
  %v19 = vpop.permute.xlu0 %18
  %22 = vset.pattern.permute.xlu0 0
  %23 = vperm.xlu0 %22, %v13
  %v24 = vpop.permute.xlu0 %23
  %27 = vset.pattern.permute.xlu0 0
  %28 = vperm.xlu0 %27, %v14
  %v29 = vpop.permute.xlu0 %28
  %32 = vset.pattern.permute.xlu0 0
  %33 = vperm.xlu0 %32, %v15
  %v34 = vpop.permute.xlu0 %33
  %v37 = vlaneseq
  %v38 = vshrl.u32 %v37, 7
  %v39 = vsub.s32 0, %v38
  %v40 = vrot.slane %v11, %v39
  %v42 = vmul.f32 %v19, %v40
  %v43 = vmul.f32 %v24, %v40
  %v44 = vmul.f32 %v29, %v40
  %v45 = vmul.f32 %v34, %v40
  %46 = vset.pattern.permute.xlu0 1
  %47 = vperm.xlu0 %46, %v12
  %v48 = vpop.permute.xlu0 %47
  %50 = vset.pattern.permute.xlu0 1
  %51 = vperm.xlu0 %50, %v13
  %v52 = vpop.permute.xlu0 %51
  %54 = vset.pattern.permute.xlu0 1
  %55 = vperm.xlu0 %54, %v14
  %v56 = vpop.permute.xlu0 %55
  %58 = vset.pattern.permute.xlu0 1
  %59 = vperm.xlu0 %58, %v15
  %v60 = vpop.permute.xlu0 %59
  %v62 = vadd.f32 %v42, %v48
  %v63 = vadd.f32 %v43, %v52
  %v64 = vadd.f32 %v44, %v56
  %v65 = vadd.f32 %v45, %v60
  %v66 = vmax.f32 %v62, 0.0
  %v67 = vmax.f32 %v63, 0.0
  %v68 = vmax.f32 %v64, 0.0
  %v69 = vmax.f32 %v65, 0.0
  %70 = vset.pattern.permute.xlu0 2
  %71 = vperm.xlu0 %70, %v12
  %v72 = vpop.permute.xlu0 %71
  %74 = vset.pattern.permute.xlu0 2
  %75 = vperm.xlu0 %74, %v13
  %v76 = vpop.permute.xlu0 %75
  %78 = vset.pattern.permute.xlu0 2
  %79 = vperm.xlu0 %78, %v14
  %v80 = vpop.permute.xlu0 %79
  %82 = vset.pattern.permute.xlu0 2
  %83 = vperm.xlu0 %82, %v15
  %v84 = vpop.permute.xlu0 %83
  %v86 = vmul.f32 %v72, %v66
  %v87 = vmul.f32 %v76, %v67
  %v88 = vmul.f32 %v80, %v68
  %v89 = vmul.f32 %v84, %v69
  %v90 = vadd.f32 %v86, %v87
  %v91 = vadd.f32 %v90, %v88
  %v92 = vadd.f32 %v91, %v89
  %v93 = vrot.slane %v92, 4
  %v94 = vadd.f32 %v92, %v93
  %v95 = vrot.slane %v94, 2
  %v96 = vadd.f32 %v94, %v95
  %v97 = vrot.slane %v96, 1
  %v98 = vadd.f32 %v96, %v97
  %99 = vset.pattern.permute.xlu0 3
  %100 = vperm.xlu0 %99, %v12
  %v101 = vpop.permute.xlu0 %100
  %v103 = vadd.f32 %v98, %v101
  %104 = vst [vmem:[%s2] sm:$0x1] %v103
  // Predicated region
  $region10: #{net_forward.1} parent=0 // pred_check
    _
  $region11: #{net_forward.1} parent=0 // pred_check_branch
    %106 = sbr.rel (0) target = $region13
  $region12: #{net_forward.1} parent=0 // pred_region
    _
  $region13: #{net_forward.1} parent=0 // pred_fallthru
    _
  // Predicated region
  $region14: #{net_forward.1} parent=0 // pred_check
    _
  $region15: #{net_forward.1} parent=0 // pred_check_branch
    %108 = sbr.rel (0) target = $region17
  $region16: #{net_forward.1} parent=0 // pred_region
    _
  $region17: #{net_forward.1} parent=0 // pred_fallthru
    _

</llo_original>
